<compile_context>
chip_gen: v7x
topology: tpu7x:2x2x1
jax: 0.10.0
libtpu: 0.0.40
codegen_flags: <defaults>
</compile_context>

<pallas_src>
import jax
import jax.numpy as jnp
from jax import lax
from jax.experimental import pallas as pl
from jax.experimental.pallas import tpu as pltpu


# ----------------------------------------------------------------------------
# Pallas kernel: pointwise conv (+ bias) on a block of Bn images.
# ----------------------------------------------------------------------------
def pointwise_conv_kernel(x_ref, w_ref, b_ref, o_ref):
    # x_ref: (Bn, Cin, HW)   block of batch images; lane axis = flattened H*W
    # w_ref: (Cout, Cin)     1x1 conv weight (squeezed OIHW)
    # b_ref: (Cout, 1)       conv bias
    # o_ref: (Bn, Cout, HW)
    y = jnp.einsum("oc,bch->boh", w_ref[...], x_ref[...],
                   preferred_element_type=jnp.float32)      # (Bn, Cout, HW)
    o_ref[...] = (y + b_ref[...]).astype(o_ref.dtype)        # bias broadcast


# ----------------------------------------------------------------------------
# Block sizing: big batch blocks (memory-bound op), conservative across gens.
# ----------------------------------------------------------------------------
_BLOCK_VMEM_BUDGET = 24 * 1024 * 1024   # bytes for double-buffered in+out blocks
_VMEM_LIMIT_BYTES = 48 * 1024 * 1024    # scoped VMEM limit handed to Mosaic
                                        # (< 64 MiB physical on v7x, >> 16/32 MiB defaults)


def _choose_batch_block(N, Cin, Cout, HW, itemsize):
    """Largest per-step batch block that fits the VMEM budget (double-buffered),
    while keeping >= 2 grid steps when possible so v7x can use both TCs."""
    per_image = 2 * (Cin + Cout) * HW * itemsize   # 2 bufs x (in + out) per image
    bn = max(1, _BLOCK_VMEM_BUDGET // per_image)
    if N >= 2:
        bn = min(bn, pl.cdiv(N, 2))                # at least 2 grid steps
    return int(min(bn, N))


def pointwise_conv2d(x_nchw, w_oihw, bias):
    """1x1 Conv2d forward.  x: (N, Cin, H, W) NCHW; w: (Cout, Cin, 1, 1)."""
    N, Cin, H, W = x_nchw.shape
    Cout = w_oihw.shape[0]
    HW = H * W

    # NCHW flattened contiguously is exactly (N, C, H*W): no transpose needed,
    # and H*W lands on the 128-lane axis (lane-dense loads and stores).
    x_flat = x_nchw.reshape(N, Cin, HW)
    w2d = w_oihw.reshape(Cout, Cin)
    b2d = bias.reshape(Cout, 1)

    itemsize = jnp.dtype(x_nchw.dtype).itemsize
    Bn = _choose_batch_block(N, Cin, Cout, HW, itemsize)
    grid_n = pl.cdiv(N, Bn)

    cost = pl.CostEstimate(
        flops=2 * N * Cout * Cin * HW,
        transcendentals=0,
        bytes_accessed=itemsize * (N * (Cin + Cout) * HW + Cout * Cin + Cout),
    )

    out = pl.pallas_call(
        pointwise_conv_kernel,
        out_shape=jax.ShapeDtypeStruct((N, Cout, HW), x_nchw.dtype),
        grid_spec=pl.GridSpec(
            grid=(grid_n,),
            in_specs=[
                pl.BlockSpec((Bn, Cin, HW), lambda n: (n, 0, 0)),
                pl.BlockSpec((Cout, Cin), lambda n: (0, 0)),
                pl.BlockSpec((Cout, 1), lambda n: (0, 0)),
            ],
            out_specs=pl.BlockSpec((Bn, Cout, HW), lambda n: (n, 0, 0)),
        ),
        compiler_params=pltpu.CompilerParams(
            # Batch blocks are independent: lets v7x shard across its 2 TCs.
            dimension_semantics=("parallel",),
            vmem_limit_bytes=_VMEM_LIMIT_BYTES,
        ),
        cost_estimate=cost,
    )(x_flat, w2d, b2d)
    return out.reshape(N, Cout, H, W)


# ----------------------------------------------------------------------------
# Parameter construction (deterministic, shapes match the PyTorch __init__).
# ----------------------------------------------------------------------------
def init_pointwise_conv(key, in_channels, out_channels):
    kw_key, kb_key = jax.random.split(key)
    fan_in = in_channels  # 1x1 kernel -> fan_in = Cin
    bound = 1.0 / (fan_in ** 0.5)
    # PyTorch Conv2d weight layout is (Cout, Cin, kh, kw) = OIHW.
    w_oihw = jax.random.uniform(kw_key, (out_channels, in_channels, 1, 1),
                                jnp.float32, -bound, bound)
    bias = jax.random.uniform(kb_key, (out_channels,), jnp.float32,
                              -bound, bound)
    return w_oihw, bias


@jax.jit
def pointwise_conv2d_forward(x_nchw, w_oihw, bias):
    return pointwise_conv2d(x_nchw, w_oihw, bias)


# ----------------------------------------------------------------------------
# Pure-JAX reference (for correctness checking of the Pallas kernel).
# ----------------------------------------------------------------------------
def reference_forward(x_nchw, w_oihw, bias):
    y = lax.conv_general_dilated(
        x_nchw, w_oihw, window_strides=(1, 1), padding="VALID",
        dimension_numbers=("NCHW", "OIHW", "NCHW"))
    return y + bias.reshape(1, -1, 1, 1)


if __name__ == "__main__":
    # Small shapes consistent with the module: batch=2, Cin=4, 16x16 spatial,
    # Cout=8.
    in_channels = 4
    out_channels = 8
    N, H, W = 2, 16, 16

    key = jax.random.PRNGKey(0)
    key, xkey = jax.random.split(key)
    x = jax.random.normal(xkey, (N, in_channels, H, W), jnp.float32)  # NCHW

    w_oihw, bias = init_pointwise_conv(key, in_channels, out_channels)

    out = pointwise_conv2d_forward(x, w_oihw, bias)
    out = jax.block_until_ready(out)

    ref = jax.block_until_ready(reference_forward(x, w_oihw, bias))
    assert out.shape == (N, out_channels, H, W), out.shape
    assert jnp.allclose(out, ref, atol=1e-5, rtol=1e-5), \
        float(jnp.max(jnp.abs(out - ref)))

    print("KERNEL_OK")
</pallas_src>

<mosaic_0001>
module attributes {stable_mosaic.version = 11 : i64} {
  func.func @pointwise_conv_kernel(%arg0: i32, %arg1: memref<1x4x256xf32, #tpu.memory_space<vmem>>, %arg2: memref<8x4xf32, #tpu.memory_space<vmem>>, %arg3: memref<8x1xf32, #tpu.memory_space<vmem>>, %arg4: memref<1x8x256xf32, #tpu.memory_space<vmem>>) attributes {dimension_semantics = [#tpu.dimension_semantics<parallel>], iteration_bounds = array<i64: 2>, scalar_prefetch = 0 : i64, scratch_operands = 0 : i64, tpu.core_type = #tpu.core_type<tc>, window_params = [{transform_indices = @transform_0, window_bounds = array<i64: 1, 4, 256>}, {pipeline_mode = #tpu.pipeline_mode<synchronous>, transform_indices = @transform_1, window_bounds = array<i64: 8, 4>}, {pipeline_mode = #tpu.pipeline_mode<synchronous>, transform_indices = @transform_2, window_bounds = array<i64: 8, 1>}, {transform_indices = @transform_3, window_bounds = array<i64: 1, 8, 256>}]} {
    %c0 = arith.constant 0 : index
    %c0_0 = arith.constant 0 : index
    %0 = vector.load %arg2[%c0, %c0_0] : memref<8x4xf32, #tpu.memory_space<vmem>>, vector<8x4xf32>
    %c0_1 = arith.constant 0 : index
    %c0_2 = arith.constant 0 : index
    %c0_3 = arith.constant 0 : index
    %1 = vector.load %arg1[%c0_1, %c0_2, %c0_3] : memref<1x4x256xf32, #tpu.memory_space<vmem>>, vector<1x4x256xf32>
    "tpu.trace_start"() <{level = 10 : i32, message = "oc,bch->boh"}> : () -> ()
    %cst = arith.constant dense<0.000000e+00> : vector<1x256x8xf32>
    %2 = tpu.matmul %1, %0, %cst {dimension_numbers = #tpu.dot_dimension_numbers<[1], [1], [0, 2], [0], [0, 0, 0, 2, 1, 0], [], []>} : vector<1x4x256xf32>, vector<8x4xf32>, vector<1x256x8xf32> -> vector<1x256x8xf32>
    %3 = tpu.transpose %2, [0, 2, 1] : vector<1x256x8xf32> -> vector<1x8x256xf32>
    "tpu.trace_stop"() : () -> ()
    %c0_4 = arith.constant 0 : index
    %c0_5 = arith.constant 0 : index
    %4 = vector.load %arg3[%c0_4, %c0_5] : memref<8x1xf32, #tpu.memory_space<vmem>>, vector<8x1xf32>
    %5 = vector.shape_cast %4 : vector<8x1xf32> to vector<1x8x1xf32>
    %6 = vector.broadcast %5 : vector<1x8x1xf32> to vector<1x8x256xf32>
    %7 = arith.addf %3, %6 : vector<1x8x256xf32>
    %c0_6 = arith.constant 0 : index
    %c0_7 = arith.constant 0 : index
    %c0_8 = arith.constant 0 : index
    %8 = vector.load %arg4[%c0_6, %c0_7, %c0_8] : memref<1x8x256xf32, #tpu.memory_space<vmem>>, vector<1x8x256xf32>
    tpu.vector_store %arg4[%c0_6, %c0_7, %c0_8], %7 {strides = array<i32>} : memref<1x8x256xf32, #tpu.memory_space<vmem>>, vector<1x8x256xf32>,
    return
  }
  func.func @transform_0(%arg0: i32) -> (i32, i32, i32) {
    %c0_i32 = arith.constant 0 : i32
    %c0_i32_0 = arith.constant 0 : i32
    %c0_i32_1 = arith.constant 0 : i32
    return %arg0, %c0_i32, %c0_i32_0 : i32, i32, i32
  }
  func.func @transform_1(%arg0: i32) -> (i32, i32) {
    %c0_i32 = arith.constant 0 : i32
    %c0_i32_0 = arith.constant 0 : i32
    %c0_i32_1 = arith.constant 0 : i32
    return %c0_i32, %c0_i32_0 : i32, i32
  }
  func.func @transform_2(%arg0: i32) -> (i32, i32) {
    %c0_i32 = arith.constant 0 : i32
    %c0_i32_0 = arith.constant 0 : i32
    %c0_i32_1 = arith.constant 0 : i32
    return %c0_i32, %c0_i32_0 : i32, i32
  }
  func.func @transform_3(%arg0: i32) -> (i32, i32, i32) {
    %c0_i32 = arith.constant 0 : i32
    %c0_i32_0 = arith.constant 0 : i32
    %c0_i32_1 = arith.constant 0 : i32
    return %arg0, %c0_i32, %c0_i32_0 : i32, i32, i32
  }
}

</mosaic_0001>

<llo_original>
// kernel: pointwise_conv2d_forward.1
$region0: #{pointwise_conv2d_forward.1}
  #allocation0 [shape = 'u32[]', space=smem, size = 0x4, offset = 0x4, fixed_abs, tag = 'smem constant byte address 0x4 - core index']
  #allocation1 [shape = 'u32[144,128]{1,0:T(1,128)}', space=vmem, size = 0x12000, scoped, tag = 'internal scratch']
  %s0 = inlined_call_operand.vmem [shape: f32[2,4,256], index: 0, kind: input, shape index: {}]
  %s1 = inlined_call_operand.vmem [shape: f32[8,4], index: 1, kind: input, shape index: {}]
  %s2 = inlined_call_operand.vmem [shape: f32[8,1], index: 2, kind: input, shape index: {}]
  %s3 = inlined_call_operand.vmem [shape: f32[2,8,256], index: 3, kind: output, shape index: {}]
  %s4 = sld [smem:[#allocation0]]
  $region45: #{pointwise_conv2d_forward.1} parent=0
    _
  %s6 = ssub.s32 1, %s4
  %s7 = scalar_select 0, %s6, %s4
  loop: start=0, step=1, limit=4
  $region2: #{pointwise_conv2d_forward.1} parent=0 // loop_pre_header
    _
  $region3: #{pointwise_conv2d_forward.1} parent=0 // loop_header
    %s9 = sphi 0, %s13
    %p10 = scmp.ge.s32.totalorder %s9, 4
    %s19 = sphi 0, %s21
    %s22 = sphi 0, %s19
    %s23 = sphi 0, %s22
    %s39 = sphi 0, %s23
    %s43 = sphi 0, %s43
    %s45 = sphi 0, %s43
    %s46 = sphi 0, %s45
    %s60 = sphi 0, %s46
    %s64 = sphi 0, %s64
    %s66 = sphi 0, %s64
    %s67 = sphi 0, %s66
    %s81 = sphi 0, %s67
    %s87 = sphi 0, %s89
    %s90 = sphi 0, %s87
    %s91 = sphi 0, %s90
    %s107 = sphi 0, %s91
  $region4: #{pointwise_conv2d_forward.1} parent=0 // loop_header_branch
    %12 = sbr.rel (%p10) target = $region8
  $region5: #{pointwise_conv2d_forward.1} parent=0 // loop_body
    %s14 = ssub.s32 %s9, 1
    %s15 = ssub.s32 %s9, 2
    %s16 = sadd.s32 %s9, 1
    %s17 = ssub.s32 %s9, %s16
    %p18 = scmp.eq.s32.totalorder %s17, 0
    %s20 = sadd.s32 %s19, 1
    %s21 = scalar_select %p18, %s19, %s20
    %p24 = pneg %p18
    %p25 = scmp.eq.s32.totalorder %s9, 1
    %p26 = por %p24, %p25
    %p27 = scmp.ne.s32.totalorder %s19, %s22
    %p28 = scmp.eq.s32.totalorder %s9, 0
    %p29 = por %p27, %p28
    %p30 = scmp.ne.s32.totalorder %s19, %s22
    %p31 = scmp.eq.s32.totalorder %s14, 1
    %p32 = por %p30, %p31
    %p33 = scmp.ne.s32.totalorder %s22, %s23
    %p34 = scmp.eq.s32.totalorder %s14, 0
    %p35 = por %p33, %p34
    %p36 = scmp.ne.s32.totalorder %s22, %s23
    %p37 = scmp.eq.s32.totalorder %s15, 1
    %p38 = por %p36, %p37
    %p40 = scmp.ne.s32.totalorder %s23, %s39
    %p41 = scmp.eq.s32.totalorder %s15, 0
    %p42 = por %p40, %p41
    %s44 = sadd.s32 %s43, 1
    %p47 = scmp.eq.s32.totalorder %s9, 1
    %p48 = scmp.ne.s32.totalorder %s43, %s45
    %p49 = scmp.eq.s32.totalorder %s9, 0
    %p50 = por %p48, %p49
    %p51 = scmp.ne.s32.totalorder %s43, %s45
    %p52 = scmp.eq.s32.totalorder %s14, 1
    %p53 = por %p51, %p52
    %p54 = scmp.ne.s32.totalorder %s45, %s46
    %p55 = scmp.eq.s32.totalorder %s14, 0
    %p56 = por %p54, %p55
    %p57 = scmp.ne.s32.totalorder %s45, %s46
    %p58 = scmp.eq.s32.totalorder %s15, 1
    %p59 = por %p57, %p58
    %p61 = scmp.ne.s32.totalorder %s46, %s60
    %p62 = scmp.eq.s32.totalorder %s15, 0
    %p63 = por %p61, %p62
    %s65 = sadd.s32 %s64, 1
    %p68 = scmp.eq.s32.totalorder %s9, 1
    %p69 = scmp.ne.s32.totalorder %s64, %s66
    %p70 = scmp.eq.s32.totalorder %s9, 0
    %p71 = por %p69, %p70
    %p72 = scmp.ne.s32.totalorder %s64, %s66
    %p73 = scmp.eq.s32.totalorder %s14, 1
    %p74 = por %p72, %p73
    %p75 = scmp.ne.s32.totalorder %s66, %s67
    %p76 = scmp.eq.s32.totalorder %s14, 0
    %p77 = por %p75, %p76
    %p78 = scmp.ne.s32.totalorder %s66, %s67
    %p79 = scmp.eq.s32.totalorder %s15, 1
    %p80 = por %p78, %p79
    %p82 = scmp.ne.s32.totalorder %s67, %s81
    %p83 = scmp.eq.s32.totalorder %s15, 0
    %p84 = por %p82, %p83
    %s85 = ssub.s32 %s9, %s16
    %p86 = scmp.eq.s32.totalorder %s85, 0
    %s88 = sadd.s32 %s87, 1
    %s89 = scalar_select %p86, %s87, %s88
    %p92 = pneg %p86
    %p93 = scmp.eq.s32.totalorder %s9, 1
    %p94 = por %p92, %p93
    %p95 = scmp.ne.s32.totalorder %s87, %s90
    %p96 = scmp.eq.s32.totalorder %s9, 0
    %p97 = por %p95, %p96
    %p98 = scmp.ne.s32.totalorder %s87, %s90
    %p99 = scmp.eq.s32.totalorder %s14, 1
    %p100 = por %p98, %p99
    %p101 = scmp.ne.s32.totalorder %s90, %s91
    %p102 = scmp.eq.s32.totalorder %s14, 0
    %p103 = por %p101, %p102
    %p104 = scmp.ne.s32.totalorder %s90, %s91
    %p105 = scmp.eq.s32.totalorder %s15, 1
    %p106 = por %p104, %p105
    %p108 = scmp.ne.s32.totalorder %s91, %s107
    %p109 = scmp.eq.s32.totalorder %s15, 0
    %p110 = por %p108, %p109
    %p111 = scmp.le.s32.totalorder 1, %s9
    %p112 = scmp.lt.s32.totalorder %s9, 3
    %p113 = pnand %p111, %p112
    %p114 = pneg %p113
    // Predicated region
    $region9: #{pointwise_conv2d_forward.1} parent=5 // pred_check
      _
    $region10: #{pointwise_conv2d_forward.1} parent=5 // pred_check_branch
      %116 = sbr.rel (%p113) target = $region12
    $region11: #{pointwise_conv2d_forward.1} parent=5 // pred_region
      %s117 = ssub.s32 %s9, 1
      // Predicated region
      $region13: #{pointwise_conv2d_forward.1} parent=11 // pred_check
        %p118 = pneg %p56
      $region14: #{pointwise_conv2d_forward.1} parent=11 // pred_check_branch
        %120 = sbr.rel (%p118) target = $region16
      $region15: #{pointwise_conv2d_forward.1} parent=11 // pred_region
        _
      $region16: #{pointwise_conv2d_forward.1} parent=11 // pred_fallthru
        _
      // Predicated region
      $region17: #{pointwise_conv2d_forward.1} parent=11 // pred_check
        %p121 = pneg %p77
      $region18: #{pointwise_conv2d_forward.1} parent=11 // pred_check_branch
        %123 = sbr.rel (%p121) target = $region20
      $region19: #{pointwise_conv2d_forward.1} parent=11 // pred_region
        _
      $region20: #{pointwise_conv2d_forward.1} parent=11 // pred_fallthru
        _
    $region12: #{pointwise_conv2d_forward.1} parent=5 // pred_fallthru
      _
    %p124 = scmp.lt.s32.totalorder %s9, 2
    // Predicated region
    $region21: #{pointwise_conv2d_forward.1} parent=5 // pred_check
      %p125 = pneg %p124
    $region22: #{pointwise_conv2d_forward.1} parent=5 // pred_check_branch
      %127 = sbr.rel (%p125) target = $region24
    $region23: #{pointwise_conv2d_forward.1} parent=5 // pred_region
      // Predicated region
      $region25: #{pointwise_conv2d_forward.1} parent=23 // pred_check
        %p128 = pneg %p29
      $region26: #{pointwise_conv2d_forward.1} parent=23 // pred_check_branch
        %130 = sbr.rel (%p128) target = $region28
      $region27: #{pointwise_conv2d_forward.1} parent=23 // pred_region
        %p131 = scmp.lt.s32.totalorder %s9, 1
        %s132 = scalar_select %p131, %s9, 1
        %s133 = smul.addr %s132, 2
        %s134 = smul.addr %s133, 4
        %s135 = scalar_lea.vmem %s0, %s134
      $region28: #{pointwise_conv2d_forward.1} parent=23 // pred_fallthru
        _
    $region24: #{pointwise_conv2d_forward.1} parent=5 // pred_fallthru
      _
    %p136 = scmp.le.s32.totalorder 1, %s9
    %p137 = scmp.lt.s32.totalorder %s9, 3
    %p138 = pnand %p136, %p137
    %p139 = pneg %p138
    // Predicated region
    $region29: #{pointwise_conv2d_forward.1} parent=5 // pred_check
      _
    $region30: #{pointwise_conv2d_forward.1} parent=5 // pred_check_branch
      %141 = sbr.rel (%p138) target = $region32
    $region31: #{pointwise_conv2d_forward.1} parent=5 // pred_region
      %s142 = ssub.s32 %s9, 1
      %p143 = scmp.lt.s32.totalorder %s14, 1
      %s144 = scalar_select %p143, %s14, 1
      %s145 = smul.addr %s144, 2
      %s146 = smul.addr %s145, 4
      %s147 = scalar_lea.vmem %s0, %s146
      %p148 = pneg %p35
      %p149 = pneg %p32
      %p150 = pneg %p56
      %p151 = pneg %p53
      %p152 = pneg %p77
      %p153 = pneg %p74
      %p154 = pneg %p103
      %p155 = pneg %p100
      %p156 = scmp.lt.s32.totalorder %s14, 1
      %s157 = scalar_select %p156, %s14, 1
      %s158 = smul.addr %s157, 2
      %s159 = smul.addr %s158, 8
      %s160 = scalar_lea.vmem %s3, %s159
      %p161 = scmp.lt.s32.totalorder %s14, 1
      %s162 = scalar_select %p161, %s14, 1
      %s163 = smul.addr %s162, 2
      %s164 = smul.addr %s163, 4
      %s165 = scalar_lea.vmem %s0, %s164
      %p166 = scmp.lt.s32.totalorder %s14, 1
      %s167 = scalar_select %p166, %s14, 1
      %s168 = smul.addr %s167, 2
      %s169 = smul.addr %s168, 8
      %s170 = scalar_lea.vmem %s3, %s169
      %v171 = vld [vmem:[%s1] sm:$0xff]
      %v172 = vld [vmem:[%s165] sm:$0xff]
      %v174 = vcombine.high %v172, %v172
      %176 = vxpose.xlu0.b32.start [1/16] %v172, 128
      %177 = vxpose.xlu0.b32.cont [2/16] 0.0, 128
      %178 = vxpose.xlu0.b32.cont [3/16] 0.0, 128
      %179 = vxpose.xlu0.b32.cont [4/16] 0.0, 128
      %180 = vxpose.xlu0.b32.cont [5/16] 0.0, 128
      %181 = vxpose.xlu0.b32.cont [6/16] 0.0, 128
      %182 = vxpose.xlu0.b32.cont [7/16] 0.0, 128
      %183 = vxpose.xlu0.b32.cont [8/16] 0.0, 128
      %184 = vxpose.xlu0.b32.cont [9/16] 0.0, 128
      %185 = vxpose.xlu0.b32.cont [10/16] 0.0, 128
      %186 = vxpose.xlu0.b32.cont [11/16] 0.0, 128
      %187 = vxpose.xlu0.b32.cont [12/16] 0.0, 128
      %188 = vxpose.xlu0.b32.cont [13/16] 0.0, 128
      %189 = vxpose.xlu0.b32.cont [14/16] 0.0, 128
      %190 = vxpose.xlu0.b32.cont [15/16] 0.0, 128
      %191 = vxpose.xlu0.b32.end [16/16] 0.0, 128
      %v192 = vpop.trf.xlu0
      %v193 = vpop.trf.xlu0
      %v194 = vpop.trf.xlu0
      %v195 = vpop.trf.xlu0
      %v196 = vpop.trf.xlu0
      %v197 = vpop.trf.xlu0
      %v198 = vpop.trf.xlu0
      %v199 = vpop.trf.xlu0
      %v200 = vpop.trf.xlu0
      %v201 = vpop.trf.xlu0
      %v202 = vpop.trf.xlu0
      %v203 = vpop.trf.xlu0
      %v204 = vpop.trf.xlu0
      %v205 = vpop.trf.xlu0
      %v206 = vpop.trf.xlu0
      %v207 = vpop.trf.xlu0
      %208 = vxpose.xlu0.b32.start [1/16] %v174, 128
      %209 = vxpose.xlu0.b32.cont [2/16] 0.0, 128
      %210 = vxpose.xlu0.b32.cont [3/16] 0.0, 128
      %211 = vxpose.xlu0.b32.cont [4/16] 0.0, 128
      %212 = vxpose.xlu0.b32.cont [5/16] 0.0, 128
      %213 = vxpose.xlu0.b32.cont [6/16] 0.0, 128
      %214 = vxpose.xlu0.b32.cont [7/16] 0.0, 128
      %215 = vxpose.xlu0.b32.cont [8/16] 0.0, 128
      %216 = vxpose.xlu0.b32.cont [9/16] 0.0, 128
      %217 = vxpose.xlu0.b32.cont [10/16] 0.0, 128
      %218 = vxpose.xlu0.b32.cont [11/16] 0.0, 128
      %219 = vxpose.xlu0.b32.cont [12/16] 0.0, 128
      %220 = vxpose.xlu0.b32.cont [13/16] 0.0, 128
      %221 = vxpose.xlu0.b32.cont [14/16] 0.0, 128
      %222 = vxpose.xlu0.b32.cont [15/16] 0.0, 128
      %223 = vxpose.xlu0.b32.end [16/16] 0.0, 128
      %v224 = vpop.trf.xlu0
      %v225 = vpop.trf.xlu0
      %v226 = vpop.trf.xlu0
      %v227 = vpop.trf.xlu0
      %v228 = vpop.trf.xlu0
      %v229 = vpop.trf.xlu0
      %v230 = vpop.trf.xlu0
      %v231 = vpop.trf.xlu0
      %v232 = vpop.trf.xlu0
      %v233 = vpop.trf.xlu0
      %v234 = vpop.trf.xlu0
      %v235 = vpop.trf.xlu0
      %v236 = vpop.trf.xlu0
      %v237 = vpop.trf.xlu0
      %v238 = vpop.trf.xlu0
      %v239 = vpop.trf.xlu0
      %vm240 = vcmask 31744
      %v242 = vsel %vm240, %v192, 0
      %v245 = vsel %vm240, %v193, 0
      %v248 = vsel %vm240, %v194, 0
      %v251 = vsel %vm240, %v195, 0
      %v254 = vsel %vm240, %v196, 0
      %v257 = vsel %vm240, %v197, 0
      %v260 = vsel %vm240, %v198, 0
      %v263 = vsel %vm240, %v199, 0
      %v266 = vsel %vm240, %v200, 0
      %v269 = vsel %vm240, %v201, 0
      %v272 = vsel %vm240, %v202, 0
      %v275 = vsel %vm240, %v203, 0
      %v278 = vsel %vm240, %v204, 0
      %v281 = vsel %vm240, %v205, 0
      %v284 = vsel %vm240, %v206, 0
      %v287 = vsel %vm240, %v207, 0
      %v290 = vsel %vm240, %v224, 0
      %v293 = vsel %vm240, %v225, 0
      %v296 = vsel %vm240, %v226, 0
      %v299 = vsel %vm240, %v227, 0
      %v302 = vsel %vm240, %v228, 0
      %v305 = vsel %vm240, %v229, 0
      %v308 = vsel %vm240, %v230, 0
      %v311 = vsel %vm240, %v231, 0
      %v314 = vsel %vm240, %v232, 0
      %v317 = vsel %vm240, %v233, 0
      %v320 = vsel %vm240, %v234, 0
      %v323 = vsel %vm240, %v235, 0
      %v326 = vsel %vm240, %v236, 0
      %v329 = vsel %vm240, %v237, 0
      %v332 = vsel %vm240, %v238, 0
      %v335 = vsel %vm240, %v239, 0
      %v338 = vsel %vm240, %v171, 0
      %340 = vmatprep.subr.mxu0 0.0
      %341 = vmatpush1.xpose.msra.mxu0 %v338
      %342 = vmatprep.subr.mxu0 0.0
      %343 = vmatpush1.xpose.msra.mxu0 0.0
      %344 = vmatprep.subr.mxu0 0.0
      %345 = vmatpush1.xpose.msra.mxu0 0.0
      %346 = vmatprep.subr.mxu0 0.0
      %347 = vmatpush1.xpose.msra.mxu0 0.0
      %348 = vmatprep.subr.mxu0 0.0
      %349 = vmatpush1.xpose.msra.mxu0 0.0
      %350 = vmatprep.subr.mxu0 0.0
      %351 = vmatpush1.xpose.msra.mxu0 0.0
      %352 = vmatprep.subr.mxu0 0.0
      %353 = vmatpush1.xpose.msra.mxu0 0.0
      %354 = vmatprep.subr.mxu0 0.0
      %355 = vmatpush1.xpose.msra.mxu0 0.0
      %356 = vmatprep.subr.mxu0 0.0
      %357 = vmatpush1.xpose.msra.mxu0 0.0
      %358 = vmatprep.subr.mxu0 0.0
      %359 = vmatpush1.xpose.msra.mxu0 0.0
      %360 = vmatprep.subr.mxu0 0.0
      %361 = vmatpush1.xpose.msra.mxu0 0.0
      %362 = vmatprep.subr.mxu0 0.0
      %363 = vmatpush1.xpose.msra.mxu0 0.0
      %364 = vmatprep.subr.mxu0 0.0
      %365 = vmatpush1.xpose.msra.mxu0 0.0
      %366 = vmatprep.subr.mxu0 0.0
      %367 = vmatpush1.xpose.msra.mxu0 0.0
      %368 = vmatprep.subr.mxu0 0.0
      %369 = vmatpush1.xpose.msra.mxu0 0.0
      %370 = vmatprep.subr.mxu0 0.0
      %371 = vmatpush1.xpose.msra.mxu0 0.0
      %372 = vmatprep.subr.mxu0 0.0
      %373 = vmatpush1.xpose.msra.mxu0 0.0
      %374 = vmatprep.subr.mxu0 0.0
      %375 = vmatpush1.xpose.msra.mxu0 0.0
      %376 = vmatprep.subr.mxu0 0.0
      %377 = vmatpush1.xpose.msra.mxu0 0.0
      %378 = vmatprep.subr.mxu0 0.0
      %379 = vmatpush1.xpose.msra.mxu0 0.0
      %380 = vmatprep.subr.mxu0 0.0
      %381 = vmatpush1.xpose.msra.mxu0 0.0
      %382 = vmatprep.subr.mxu0 0.0
      %383 = vmatpush1.xpose.msra.mxu0 0.0
      %384 = vmatprep.subr.mxu0 0.0
      %385 = vmatpush1.xpose.msra.mxu0 0.0
      %386 = vmatprep.subr.mxu0 0.0
      %387 = vmatpush1.xpose.msra.mxu0 0.0
      %388 = vmatprep.subr.mxu0 0.0
      %389 = vmatpush1.xpose.msra.mxu0 0.0
      %390 = vmatprep.subr.mxu0 0.0
      %391 = vmatpush1.xpose.msra.mxu0 0.0
      %392 = vmatprep.subr.mxu0 0.0
      %393 = vmatpush1.xpose.msra.mxu0 0.0
      %394 = vmatprep.subr.mxu0 0.0
      %395 = vmatpush1.xpose.msra.mxu0 0.0
      %396 = vmatprep.subr.mxu0 0.0
      %397 = vmatpush1.xpose.msra.mxu0 0.0
      %398 = vmatprep.subr.mxu0 0.0
      %399 = vmatpush1.xpose.msra.mxu0 0.0
      %400 = vmatprep.subr.mxu0 0.0
      %401 = vmatpush1.xpose.msra.mxu0 0.0
      %402 = vmatprep.subr.mxu0 0.0
      %403 = vmatpush1.xpose.msra.mxu0 0.0
      %404 = vmatprep.mubr.f32.mxu0 0.0
      %405 = vmatmul.mubr.f32.gmra.mrb[0].mxu0 %v242
      %v406 = vpop.f32.mrb[0].mxu0
      %v407 = vadd.f32 0.0, %v406
      %v408 = vpop.f32.mrb[0].mxu0
      %409 = vmatprep.mubr.f32.mxu0 0.0
      %410 = vmatmul.mubr.f32.gmra.mrb[0].mxu0 %v245
      %v411 = vpop.f32.mrb[0].mxu0
      %v412 = vadd.f32 0.0, %v411
      %v413 = vpop.f32.mrb[0].mxu0
      %414 = vmatprep.mubr.f32.mxu0 0.0
      %415 = vmatmul.mubr.f32.gmra.mrb[0].mxu0 %v248
      %v416 = vpop.f32.mrb[0].mxu0
      %v417 = vadd.f32 0.0, %v416
      %v418 = vpop.f32.mrb[0].mxu0
      %419 = vmatprep.mubr.f32.mxu0 0.0
      %420 = vmatmul.mubr.f32.gmra.mrb[0].mxu0 %v251
      %v421 = vpop.f32.mrb[0].mxu0
      %v422 = vadd.f32 0.0, %v421
      %v423 = vpop.f32.mrb[0].mxu0
      %424 = vmatprep.mubr.f32.mxu0 0.0
      %425 = vmatmul.mubr.f32.gmra.mrb[0].mxu0 %v254
      %v426 = vpop.f32.mrb[0].mxu0
      %v427 = vadd.f32 0.0, %v426
      %v428 = vpop.f32.mrb[0].mxu0
      %429 = vmatprep.mubr.f32.mxu0 0.0
      %430 = vmatmul.mubr.f32.gmra.mrb[0].mxu0 %v257
      %v431 = vpop.f32.mrb[0].mxu0
      %v432 = vadd.f32 0.0, %v431
      %v433 = vpop.f32.mrb[0].mxu0
      %434 = vmatprep.mubr.f32.mxu0 0.0
      %435 = vmatmul.mubr.f32.gmra.mrb[0].mxu0 %v260
      %v436 = vpop.f32.mrb[0].mxu0
      %v437 = vadd.f32 0.0, %v436
      %v438 = vpop.f32.mrb[0].mxu0
      %439 = vmatprep.mubr.f32.mxu0 0.0
      %440 = vmatmul.mubr.f32.gmra.mrb[0].mxu0 %v263
      %v441 = vpop.f32.mrb[0].mxu0
      %v442 = vadd.f32 0.0, %v441
      %v443 = vpop.f32.mrb[0].mxu0
      %444 = vmatprep.mubr.f32.mxu0 0.0
      %445 = vmatmul.mubr.f32.gmra.mrb[0].mxu0 %v266
      %v446 = vpop.f32.mrb[0].mxu0
      %v447 = vadd.f32 0.0, %v446
      %v448 = vpop.f32.mrb[0].mxu0
      %449 = vmatprep.mubr.f32.mxu0 0.0
      %450 = vmatmul.mubr.f32.gmra.mrb[0].mxu0 %v269
      %v451 = vpop.f32.mrb[0].mxu0
      %v452 = vadd.f32 0.0, %v451
      %v453 = vpop.f32.mrb[0].mxu0
      %454 = vmatprep.mubr.f32.mxu0 0.0
      %455 = vmatmul.mubr.f32.gmra.mrb[0].mxu0 %v272
      %v456 = vpop.f32.mrb[0].mxu0
      %v457 = vadd.f32 0.0, %v456
      %v458 = vpop.f32.mrb[0].mxu0
      %459 = vmatprep.mubr.f32.mxu0 0.0
      %460 = vmatmul.mubr.f32.gmra.mrb[0].mxu0 %v275
      %v461 = vpop.f32.mrb[0].mxu0
      %v462 = vadd.f32 0.0, %v461
      %v463 = vpop.f32.mrb[0].mxu0
      %464 = vmatprep.mubr.f32.mxu0 0.0
      %465 = vmatmul.mubr.f32.gmra.mrb[0].mxu0 %v278
      %v466 = vpop.f32.mrb[0].mxu0
      %v467 = vadd.f32 0.0, %v466
      %v468 = vpop.f32.mrb[0].mxu0
      %469 = vmatprep.mubr.f32.mxu0 0.0
      %470 = vmatmul.mubr.f32.gmra.mrb[0].mxu0 %v281
      %v471 = vpop.f32.mrb[0].mxu0
      %v472 = vadd.f32 0.0, %v471
      %v473 = vpop.f32.mrb[0].mxu0
      %474 = vmatprep.mubr.f32.mxu0 0.0
      %475 = vmatmul.mubr.f32.gmra.mrb[0].mxu0 %v284
      %v476 = vpop.f32.mrb[0].mxu0
      %v477 = vadd.f32 0.0, %v476
      %v478 = vpop.f32.mrb[0].mxu0
      %479 = vmatprep.mubr.f32.mxu0 0.0
      %480 = vmatmul.mubr.f32.gmra.mrb[0].mxu0 %v287
      %v481 = vpop.f32.mrb[0].mxu0
      %v482 = vadd.f32 0.0, %v481
      %v483 = vpop.f32.mrb[0].mxu0
      %484 = vmatprep.mubr.f32.mxu0 0.0
      %485 = vmatmul.mubr.f32.gmra.mrb[0].mxu0 %v290
      %v486 = vpop.f32.mrb[0].mxu0
      %v487 = vadd.f32 0.0, %v486
      %v488 = vpop.f32.mrb[0].mxu0
      %489 = vmatprep.mubr.f32.mxu0 0.0
      %490 = vmatmul.mubr.f32.gmra.mrb[0].mxu0 %v293
      %v491 = vpop.f32.mrb[0].mxu0
      %v492 = vadd.f32 0.0, %v491
      %v493 = vpop.f32.mrb[0].mxu0
      %494 = vmatprep.mubr.f32.mxu0 0.0
      %495 = vmatmul.mubr.f32.gmra.mrb[0].mxu0 %v296
      %v496 = vpop.f32.mrb[0].mxu0
      %v497 = vadd.f32 0.0, %v496
      %v498 = vpop.f32.mrb[0].mxu0
      %499 = vmatprep.mubr.f32.mxu0 0.0
      %500 = vmatmul.mubr.f32.gmra.mrb[0].mxu0 %v299
      %v501 = vpop.f32.mrb[0].mxu0
      %v502 = vadd.f32 0.0, %v501
      %v503 = vpop.f32.mrb[0].mxu0
      %504 = vmatprep.mubr.f32.mxu0 0.0
      %505 = vmatmul.mubr.f32.gmra.mrb[0].mxu0 %v302
      %v506 = vpop.f32.mrb[0].mxu0
      %v507 = vadd.f32 0.0, %v506
      %v508 = vpop.f32.mrb[0].mxu0
      %509 = vmatprep.mubr.f32.mxu0 0.0
      %510 = vmatmul.mubr.f32.gmra.mrb[0].mxu0 %v305
      %v511 = vpop.f32.mrb[0].mxu0
      %v512 = vadd.f32 0.0, %v511
      %v513 = vpop.f32.mrb[0].mxu0
      %514 = vmatprep.mubr.f32.mxu0 0.0
      %515 = vmatmul.mubr.f32.gmra.mrb[0].mxu0 %v308
      %v516 = vpop.f32.mrb[0].mxu0
      %v517 = vadd.f32 0.0, %v516
      %v518 = vpop.f32.mrb[0].mxu0
      %519 = vmatprep.mubr.f32.mxu0 0.0
      %520 = vmatmul.mubr.f32.gmra.mrb[0].mxu0 %v311
      %v521 = vpop.f32.mrb[0].mxu0
      %v522 = vadd.f32 0.0, %v521
      %v523 = vpop.f32.mrb[0].mxu0
      %524 = vmatprep.mubr.f32.mxu0 0.0
      %525 = vmatmul.mubr.f32.gmra.mrb[0].mxu0 %v314
      %v526 = vpop.f32.mrb[0].mxu0
      %v527 = vadd.f32 0.0, %v526
      %v528 = vpop.f32.mrb[0].mxu0
      %529 = vmatprep.mubr.f32.mxu0 0.0
      %530 = vmatmul.mubr.f32.gmra.mrb[0].mxu0 %v317
      %v531 = vpop.f32.mrb[0].mxu0
      %v532 = vadd.f32 0.0, %v531
      %v533 = vpop.f32.mrb[0].mxu0
      %534 = vmatprep.mubr.f32.mxu0 0.0
      %535 = vmatmul.mubr.f32.gmra.mrb[0].mxu0 %v320
      %v536 = vpop.f32.mrb[0].mxu0
      %v537 = vadd.f32 0.0, %v536
      %v538 = vpop.f32.mrb[0].mxu0
      %539 = vmatprep.mubr.f32.mxu0 0.0
      %540 = vmatmul.mubr.f32.gmra.mrb[0].mxu0 %v323
      %v541 = vpop.f32.mrb[0].mxu0
      %v542 = vadd.f32 0.0, %v541
      %v543 = vpop.f32.mrb[0].mxu0
      %544 = vmatprep.mubr.f32.mxu0 0.0
      %545 = vmatmul.mubr.f32.gmra.mrb[0].mxu0 %v326
      %v546 = vpop.f32.mrb[0].mxu0
      %v547 = vadd.f32 0.0, %v546
      %v548 = vpop.f32.mrb[0].mxu0
      %549 = vmatprep.mubr.f32.mxu0 0.0
      %550 = vmatmul.mubr.f32.gmra.mrb[0].mxu0 %v329
      %v551 = vpop.f32.mrb[0].mxu0
      %v552 = vadd.f32 0.0, %v551
      %v553 = vpop.f32.mrb[0].mxu0
      %554 = vmatprep.mubr.f32.mxu0 0.0
      %555 = vmatmul.mubr.f32.gmra.mrb[0].mxu0 %v332
      %v556 = vpop.f32.mrb[0].mxu0
      %v557 = vadd.f32 0.0, %v556
      %v558 = vpop.f32.mrb[0].mxu0
      %559 = vmatprep.mubr.f32.mxu0 0.0
      %560 = vmatmul.mubr.f32.gmra.mrb[0].mxu0 %v335
      %v561 = vpop.f32.mrb[0].mxu0
      %v562 = vadd.f32 0.0, %v561
      %v563 = vpop.f32.mrb[0].mxu0
      %564 = vdwg.mxu0
      %565 = vxpose.xlu0.b32.start [1/16] %v407, 128
      %566 = vxpose.xlu0.b32.cont [2/16] %v412, 128
      %567 = vxpose.xlu0.b32.cont [3/16] %v417, 128
      %568 = vxpose.xlu0.b32.cont [4/16] %v422, 128
      %569 = vxpose.xlu0.b32.cont [5/16] %v427, 128
      %570 = vxpose.xlu0.b32.cont [6/16] %v432, 128
      %571 = vxpose.xlu0.b32.cont [7/16] %v437, 128
      %572 = vxpose.xlu0.b32.cont [8/16] %v442, 128
      %573 = vxpose.xlu0.b32.cont [9/16] %v447, 128
      %574 = vxpose.xlu0.b32.cont [10/16] %v452, 128
      %575 = vxpose.xlu0.b32.cont [11/16] %v457, 128
      %576 = vxpose.xlu0.b32.cont [12/16] %v462, 128
      %577 = vxpose.xlu0.b32.cont [13/16] %v467, 128
      %578 = vxpose.xlu0.b32.cont [14/16] %v472, 128
      %579 = vxpose.xlu0.b32.cont [15/16] %v477, 128
      %580 = vxpose.xlu0.b32.end [16/16] %v482, 128
      %v581 = vpop.trf.xlu0
      %v582 = vpop.trf.xlu0
      %v583 = vpop.trf.xlu0
      %v584 = vpop.trf.xlu0
      %v585 = vpop.trf.xlu0
      %v586 = vpop.trf.xlu0
      %v587 = vpop.trf.xlu0
      %v588 = vpop.trf.xlu0
      %v589 = vpop.trf.xlu0
      %v590 = vpop.trf.xlu0
      %v591 = vpop.trf.xlu0
      %v592 = vpop.trf.xlu0
      %v593 = vpop.trf.xlu0
      %v594 = vpop.trf.xlu0
      %v595 = vpop.trf.xlu0
      %v596 = vpop.trf.xlu0
      %597 = vxpose.xlu0.b32.start [1/16] %v487, 128
      %598 = vxpose.xlu0.b32.cont [2/16] %v492, 128
      %599 = vxpose.xlu0.b32.cont [3/16] %v497, 128
      %600 = vxpose.xlu0.b32.cont [4/16] %v502, 128
      %601 = vxpose.xlu0.b32.cont [5/16] %v507, 128
      %602 = vxpose.xlu0.b32.cont [6/16] %v512, 128
      %603 = vxpose.xlu0.b32.cont [7/16] %v517, 128
      %604 = vxpose.xlu0.b32.cont [8/16] %v522, 128
      %605 = vxpose.xlu0.b32.cont [9/16] %v527, 128
      %606 = vxpose.xlu0.b32.cont [10/16] %v532, 128
      %607 = vxpose.xlu0.b32.cont [11/16] %v537, 128
      %608 = vxpose.xlu0.b32.cont [12/16] %v542, 128
      %609 = vxpose.xlu0.b32.cont [13/16] %v547, 128
      %610 = vxpose.xlu0.b32.cont [14/16] %v552, 128
      %611 = vxpose.xlu0.b32.cont [15/16] %v557, 128
      %612 = vxpose.xlu0.b32.end [16/16] %v562, 128
      %v613 = vpop.trf.xlu0
      %v614 = vpop.trf.xlu0
      %v615 = vpop.trf.xlu0
      %v616 = vpop.trf.xlu0
      %v617 = vpop.trf.xlu0
      %v618 = vpop.trf.xlu0
      %v619 = vpop.trf.xlu0
      %v620 = vpop.trf.xlu0
      %v621 = vpop.trf.xlu0
      %v622 = vpop.trf.xlu0
      %v623 = vpop.trf.xlu0
      %v624 = vpop.trf.xlu0
      %v625 = vpop.trf.xlu0
      %v626 = vpop.trf.xlu0
      %v627 = vpop.trf.xlu0
      %v628 = vpop.trf.xlu0
      %v629 = vld [vmem:[%s2] sm:$0xff]
      %631 = vset.pattern.permute.xlu0 0
      %632 = vperm.xlu0 %631, %v629
      %v633 = vpop.permute.xlu0 %632
      %v635 = vadd.f32 %v581, %v633
      %v636 = vadd.f32 %v613, %v633
      %637 = vst [vmem:[%s170] sm:$0xff] %v635
      %638 = vst [vmem:[%s170 + $0x8] sm:$0xff] %v636
      %p639 = scmp.lt.s32.totalorder %s14, 1
      %s640 = scalar_select %p639, %s14, 1
      %s641 = smul.addr %s640, 2
      %s642 = smul.addr %s641, 8
      %s643 = scalar_lea.vmem %s3, %s642
      // Predicated region
      $region33: #{pointwise_conv2d_forward.1} parent=31 // pred_check
        %p644 = pneg %p100
      $region34: #{pointwise_conv2d_forward.1} parent=31 // pred_check_branch
        %646 = sbr.rel (%p644) target = $region36
      $region35: #{pointwise_conv2d_forward.1} parent=31 // pred_region
        _
      $region36: #{pointwise_conv2d_forward.1} parent=31 // pred_fallthru
        _
    $region32: #{pointwise_conv2d_forward.1} parent=5 // pred_fallthru
      _
    %p647 = scmp.le.s32.totalorder 2, %s9
    // Predicated region
    $region37: #{pointwise_conv2d_forward.1} parent=5 // pred_check
      %p648 = pneg %p647
    $region38: #{pointwise_conv2d_forward.1} parent=5 // pred_check_branch
      %650 = sbr.rel (%p648) target = $region40
    $region39: #{pointwise_conv2d_forward.1} parent=5 // pred_region
      %s651 = ssub.s32 %s9, 2
      // Predicated region
      $region41: #{pointwise_conv2d_forward.1} parent=39 // pred_check
        %p652 = pneg %p106
      $region42: #{pointwise_conv2d_forward.1} parent=39 // pred_check_branch
        %654 = sbr.rel (%p652) target = $region44
      $region43: #{pointwise_conv2d_forward.1} parent=39 // pred_region
        %p655 = scmp.lt.s32.totalorder %s15, 1
        %s656 = scalar_select %p655, %s15, 1
        %s657 = smul.addr %s656, 2
        %s658 = smul.addr %s657, 8
        %s659 = scalar_lea.vmem %s3, %s658
      $region44: #{pointwise_conv2d_forward.1} parent=39 // pred_fallthru
        _
    $region40: #{pointwise_conv2d_forward.1} parent=5 // pred_fallthru
      _
  $region6: #{pointwise_conv2d_forward.1} parent=0 // loop_footer
    %s13 = sadd.s32 1, %s9
  $region7: #{pointwise_conv2d_forward.1} parent=0 // loop_footer_branch
    %8 = sbr.rel target = $region3
  $region8: #{pointwise_conv2d_forward.1} parent=0 // loop_exit
    _

</llo_original>
